<compile_context>
chip_gen: v7x
topology: tpu7x:2x2x1
jax: 0.10.0
libtpu: 0.0.40
codegen_flags: <defaults>
</compile_context>

<pallas_src>
import functools

import jax
import jax.numpy as jnp
import numpy as np
from jax.experimental import pallas as pl
from jax.experimental.pallas import tpu as pltpu


def _affine_coupling_kernel(patches_ref, x2_ref, w1_ref, b1_ref, w2_ref, b2_ref,
                            w3_ref, b3_ref, mask_ref, y2_ref, ld_ref, *, img_w):
    f32 = jnp.float32
    C = b3_ref.shape[0]            # output channels of conv3 (= both heads)
    Ch = C // 2                    # channels per head  (= channels // 2)
    N = patches_ref.shape[-1]      # H * W, lane axis
    cdt = w1_ref.dtype             # matmul operand dtype (f32 or bf16)

    # ---- conv1: 3x3 SAME (pre-im2col'd in the wrapper) + ReLU: ONE matmul ----
    h1 = jnp.dot(w1_ref[...], patches_ref[0], preferred_element_type=f32)
    h1 = jnp.maximum(h1 + b1_ref[...], 0.0)                   # (hidden, N) f32

    # ---- conv2: 1x1 + ReLU: one matmul --------------------------------------
    h2 = jnp.dot(w2_ref[...], h1.astype(cdt), preferred_element_type=f32)
    h2 = jnp.maximum(h2 + b2_ref[...], 0.0)                   # (hidden, N) f32

    # ---- conv3: 3x3 SAME, shift+scale heads fused ----------------------------
    # One channel-mixing matmul for all nine taps at once; each tap is then a
    # lane roll (XLU) of its (C, N) slice plus a boundary (zero-padding) mask.
    q = jnp.dot(w3_ref[...], h2.astype(cdt),
                preferred_element_type=f32)                   # (9*C, N) f32
    acc = jnp.zeros((C, N), f32)
    for tap in range(9):
        ky, kx = divmod(tap, 3)
        dy, dx = ky - 1, kx - 1
        q_tap = q[tap * C:(tap + 1) * C, :]
        s = dy * img_w + dx                    # flat pixel offset of this tap
        if s != 0:
            # want q_tap'[p] = q_tap[(p + s) % N]  (== jnp.roll(q_tap, -s))
            q_tap = pltpu.roll(q_tap, shift=(-s) % N, axis=1)
        if dy == 0 and dx == 0:                # center tap: mask is all-ones
            acc = acc + q_tap
        else:
            acc = acc + mask_ref[tap] * q_tap
    acc = acc + b3_ref[...]

    shift = acc[:Ch, :]
    z = acc[Ch:, :] + 2.0
    scale = jax.nn.sigmoid(z)

    # ---- affine coupling: y2 = x2 * scale + shift (lane-dense store) ---------
    y2_ref[0] = (x2_ref[0] * scale + shift).astype(y2_ref.dtype)

    # ---- logdet = sum(log(sigmoid(z))) = -sum(softplus(-z))  (stable form) ---
    neg_z = -z
    log_scale = -(jnp.maximum(neg_z, 0.0)
                  + jnp.log(1.0 + jnp.exp(-jnp.abs(neg_z))))
    ld = jnp.sum(log_scale, axis=1, keepdims=True)            # (Ch, 1)
    ld = jnp.sum(ld, axis=0, keepdims=True)                   # (1, 1)
    ld_ref[0] = ld.astype(ld_ref.dtype)


def affine_coupling_forward(x_nchw, params, *, compute_dtype=jnp.float32):
    """Forward (reverse=False) of the Glow AffineCoupling layer. NCHW in/out."""
    B, C, H, W = x_nchw.shape
    Ch = C // 2
    N = H * W
    w1, b1, w2, b2, w3, b3 = (params["w1"], params["b1"], params["w2"],
                              params["b2"], params["w3"], params["b3"])
    hidden = w2.shape[0]
    cdt = compute_dtype

    x1 = x_nchw[:, :Ch]                                   # (B, Ch, H, W)
    x2 = x_nchw[:, Ch:].reshape(B, Ch, N)                 # (B, Ch, H*W), f32

    # Transposed im2col for conv1: patches[b, (ky*3+kx)*Ch + c, y*W + x]
    #   = x1_pad[b, c, y+ky, x+kx]   -> conv1 becomes a single fat matmul.
    x1p = jnp.pad(x1, ((0, 0), (0, 0), (1, 1), (1, 1)))
    patches = jnp.concatenate(
        [x1p[:, :, ky:ky + H, kx:kx + W].reshape(B, Ch, N)
         for ky in range(3) for kx in range(3)], axis=1).astype(cdt)

    # Weights in "output-channels-first" (transposed) form.
    w1t = jnp.transpose(w1, (3, 0, 1, 2)).reshape(hidden, 9 * Ch).astype(cdt)
    w2t = jnp.transpose(w2, (1, 0)).astype(cdt)
    w3t = jnp.transpose(w3, (0, 1, 3, 2)).reshape(9 * C, hidden).astype(cdt)
    b1c = b1.reshape(hidden, 1).astype(jnp.float32)
    b2c = b2.reshape(hidden, 1).astype(jnp.float32)
    b3c = b3.reshape(C, 1).astype(jnp.float32)

    # Per-tap zero-padding validity masks of the 3x3 SAME conv (static, host).
    ys, xs = np.arange(H)[:, None], np.arange(W)[None, :]
    mask_list = []
    for ky in range(3):
        for kx in range(3):
            dy, dx = ky - 1, kx - 1
            valid = ((ys + dy >= 0) & (ys + dy < H)
                     & (xs + dx >= 0) & (xs + dx < W))
            mask_list.append(valid.reshape(-1))
    masks = jnp.asarray(np.stack(mask_list), dtype=jnp.float32).reshape(9, 1, N)

    grid_spec = pltpu.PrefetchScalarGridSpec(
        num_scalar_prefetch=0,
        grid=(B,),
        in_specs=[
            pl.BlockSpec((1, 9 * Ch, N), lambda b: (b, 0, 0)),   # im2col patches
            pl.BlockSpec((1, Ch, N), lambda b: (b, 0, 0)),       # x2
            pl.BlockSpec((hidden, 9 * Ch), lambda b: (0, 0)),    # w1 (transposed)
            pl.BlockSpec((hidden, 1), lambda b: (0, 0)),         # b1
            pl.BlockSpec((hidden, hidden), lambda b: (0, 0)),    # w2 (transposed)
            pl.BlockSpec((hidden, 1), lambda b: (0, 0)),         # b2
            pl.BlockSpec((9 * C, hidden), lambda b: (0, 0)),     # w3 (all taps+heads)
            pl.BlockSpec((C, 1), lambda b: (0, 0)),              # b3
            pl.BlockSpec((9, 1, N), lambda b: (0, 0, 0)),        # tap masks
        ],
        out_specs=[
            pl.BlockSpec((1, Ch, N), lambda b: (b, 0, 0)),       # y2 (lane-dense)
            pl.BlockSpec((1, 1, 1), lambda b: (b, 0, 0)),        # logdet scalar
        ],
    )

    y2_flat, ld = pl.pallas_call(
        functools.partial(_affine_coupling_kernel, img_w=W),
        out_shape=(jax.ShapeDtypeStruct((B, Ch, N), x_nchw.dtype),
                   jax.ShapeDtypeStruct((B, 1, 1), jnp.float32)),
        grid_spec=grid_spec,
        compiler_params=pltpu.CompilerParams(
            dimension_semantics=("parallel",)),
    )(patches, x2, w1t, b1c, w2t, b2c, w3t, b3c, masks)

    y = jnp.concatenate([x1, y2_flat.reshape(B, Ch, H, W)], axis=1)
    return y, ld[:, 0, 0]


def reference_forward(x_nchw, params):
    """Pure-JAX reference (matches the PyTorch module semantics)."""
    w1, b1, w2, b2, w3, b3 = (params["w1"], params["b1"], params["w2"],
                              params["b2"], params["w3"], params["b3"])
    hidden = w2.shape[0]
    B, C, H, W = x_nchw.shape
    Ch = C // 2
    x = jnp.transpose(x_nchw, (0, 2, 3, 1))
    x1, x2 = x[..., :Ch], x[..., Ch:]
    dn = ("NHWC", "HWIO", "NHWC")
    h = jax.lax.conv_general_dilated(x1, w1, (1, 1), "SAME",
                                     dimension_numbers=dn) + b1[None, None]
    h = jnp.maximum(h, 0.0)
    h = jax.lax.conv_general_dilated(h, w2.reshape(1, 1, hidden, hidden), (1, 1),
                                     "SAME", dimension_numbers=dn) + b2[None, None]
    h = jnp.maximum(h, 0.0)
    h = jax.lax.conv_general_dilated(h, w3, (1, 1), "SAME",
                                     dimension_numbers=dn) + b3[None, None]
    shift, scale_raw = h[..., :Ch], h[..., Ch:]
    scale = jax.nn.sigmoid(scale_raw + 2.0)
    logdet = jnp.sum(jnp.log(scale), axis=(1, 2, 3))
    y2 = x2 * scale + shift
    y = jnp.concatenate([x1, y2], axis=-1)
    return jnp.transpose(y, (0, 3, 1, 2)), logdet


if __name__ == "__main__":
    B, C, H, W = 2, 4, 16, 16       # channels=4 -> coupling halves of 2
    hidden = 32
    Ch = C // 2

    key = jax.random.PRNGKey(0)
    kxi, k1, k2, k3, k4, k5, k6 = jax.random.split(key, 7)
    x = jax.random.normal(kxi, (B, C, H, W), jnp.float32)

    # Deterministic synthetic parameters (HWIO layout; 1x1 conv stored as (in,out)).
    params = dict(
        w1=0.1 * jax.random.normal(k1, (3, 3, Ch, hidden), jnp.float32),
        b1=0.05 * jax.random.normal(k2, (1, hidden), jnp.float32),
        w2=0.1 * jax.random.normal(k3, (hidden, hidden), jnp.float32),
        b2=0.05 * jax.random.normal(k4, (1, hidden), jnp.float32),
        w3=0.1 * jax.random.normal(k5, (3, 3, hidden, C), jnp.float32),
        b3=0.05 * jax.random.normal(k6, (1, C), jnp.float32),
    )

    y_ref, logdet_ref = reference_forward(x, params)

    # f32 matmul path (v5e-friendly): strict tolerance against the reference.
    fwd = jax.jit(affine_coupling_forward)
    y, logdet = fwd(x, params)
    jax.block_until_ready((y, logdet))
    np.testing.assert_allclose(np.asarray(y), np.asarray(y_ref),
                               rtol=1e-4, atol=1e-4)
    np.testing.assert_allclose(np.asarray(logdet), np.asarray(logdet_ref),
                               rtol=1e-4, atol=1e-4)

    # bf16 MXU-feeding path (v6e/v7x optimization): elementwise math stays f32.
    fwd_bf16 = jax.jit(functools.partial(affine_coupling_forward,
                                         compute_dtype=jnp.bfloat16))
    y_b, logdet_b = fwd_bf16(x, params)
    jax.block_until_ready((y_b, logdet_b))
    np.testing.assert_allclose(np.asarray(y_b), np.asarray(y_ref),
                               rtol=5e-2, atol=5e-2)
    np.testing.assert_allclose(np.asarray(logdet_b), np.asarray(logdet_ref),
                               rtol=5e-2, atol=5e-2)

    # TODO(synk): reverse=True branch ((x2 - shift) / scale, -logdet) would be a
    # second kernel variant with identical structure.
    print("KERNEL_OK")
</pallas_src>

<mosaic_0001>
module attributes {stable_mosaic.version = 11 : i64} {
  func.func @_affine_coupling_kernel(%arg0: i32, %arg1: memref<1x18x256xf32, #tpu.memory_space<vmem>>, %arg2: memref<1x2x256xf32, #tpu.memory_space<vmem>>, %arg3: memref<32x18xf32, #tpu.memory_space<vmem>>, %arg4: memref<32x1xf32, #tpu.memory_space<vmem>>, %arg5: memref<32x32xf32, #tpu.memory_space<vmem>>, %arg6: memref<32x1xf32, #tpu.memory_space<vmem>>, %arg7: memref<36x32xf32, #tpu.memory_space<vmem>>, %arg8: memref<4x1xf32, #tpu.memory_space<vmem>>, %arg9: memref<9x1x256xf32, #tpu.memory_space<vmem>>, %arg10: memref<1x2x256xf32, #tpu.memory_space<vmem>>, %arg11: memref<1x1x1xf32, #tpu.memory_space<vmem>>) attributes {dimension_semantics = [#tpu.dimension_semantics<parallel>], iteration_bounds = array<i64: 2>, scalar_prefetch = 0 : i64, scratch_operands = 0 : i64, tpu.core_type = #tpu.core_type<tc>, window_params = [{transform_indices = @transform_0, window_bounds = array<i64: 1, 18, 256>}, {transform_indices = @transform_1, window_bounds = array<i64: 1, 2, 256>}, {pipeline_mode = #tpu.pipeline_mode<synchronous>, transform_indices = @transform_2, window_bounds = array<i64: 32, 18>}, {pipeline_mode = #tpu.pipeline_mode<synchronous>, transform_indices = @transform_3, window_bounds = array<i64: 32, 1>}, {pipeline_mode = #tpu.pipeline_mode<synchronous>, transform_indices = @transform_4, window_bounds = array<i64: 32, 32>}, {pipeline_mode = #tpu.pipeline_mode<synchronous>, transform_indices = @transform_5, window_bounds = array<i64: 32, 1>}, {pipeline_mode = #tpu.pipeline_mode<synchronous>, transform_indices = @transform_6, window_bounds = array<i64: 36, 32>}, {pipeline_mode = #tpu.pipeline_mode<synchronous>, transform_indices = @transform_7, window_bounds = array<i64: 4, 1>}, {pipeline_mode = #tpu.pipeline_mode<synchronous>, transform_indices = @transform_8, window_bounds = array<i64: 9, 1, 256>}, {transform_indices = @transform_9, window_bounds = array<i64: 1, 2, 256>}, {transform_indices = @transform_10, window_bounds = array<i64: 1, 1, 1>}]} {
    %c0 = arith.constant 0 : index
    %c0_0 = arith.constant 0 : index
    %0 = vector.load %arg3[%c0, %c0_0] : memref<32x18xf32, #tpu.memory_space<vmem>>, vector<32x18xf32>
    %c0_1 = arith.constant 0 : index
    %c0_2 = arith.constant 0 : index
    %c0_3 = arith.constant 0 : index
    %1 = vector.load %arg1[%c0_1, %c0_2, %c0_3] : memref<1x18x256xf32, #tpu.memory_space<vmem>>, vector<1x18x256xf32>
    %2 = vector.shape_cast %1 : vector<1x18x256xf32> to vector<18x256xf32>
    %cst = arith.constant dense<0.000000e+00> : vector<32x256xf32>
    %3 = tpu.matmul %0, %2, %cst {dimension_numbers = #tpu.dot_dimension_numbers<[1], [0], [0], [1], [0, 0, 1, 1], [], []>} : vector<32x18xf32>, vector<18x256xf32>, vector<32x256xf32> -> vector<32x256xf32>
    %c0_4 = arith.constant 0 : index
    %c0_5 = arith.constant 0 : index
    %4 = vector.load %arg4[%c0_4, %c0_5] : memref<32x1xf32, #tpu.memory_space<vmem>>, vector<32x1xf32>
    %5 = vector.broadcast %4 : vector<32x1xf32> to vector<32x256xf32>
    %6 = arith.addf %3, %5 : vector<32x256xf32>
    %cst_6 = arith.constant 0.000000e+00 : f32
    %7 = vector.broadcast %cst_6 : f32 to vector<32x256xf32>
    %8 = arith.maximumf %6, %7 : vector<32x256xf32>
    %c0_7 = arith.constant 0 : index
    %c0_8 = arith.constant 0 : index
    %9 = vector.load %arg5[%c0_7, %c0_8] : memref<32x32xf32, #tpu.memory_space<vmem>>, vector<32x32xf32>
    %cst_9 = arith.constant dense<0.000000e+00> : vector<32x256xf32>
    %10 = tpu.matmul %9, %8, %cst_9 {dimension_numbers = #tpu.dot_dimension_numbers<[1], [0], [0], [1], [0, 0, 1, 1], [], []>} : vector<32x32xf32>, vector<32x256xf32>, vector<32x256xf32> -> vector<32x256xf32>
    %c0_10 = arith.constant 0 : index
    %c0_11 = arith.constant 0 : index
    %11 = vector.load %arg6[%c0_10, %c0_11] : memref<32x1xf32, #tpu.memory_space<vmem>>, vector<32x1xf32>
    %12 = vector.broadcast %11 : vector<32x1xf32> to vector<32x256xf32>
    %13 = arith.addf %10, %12 : vector<32x256xf32>
    %cst_12 = arith.constant 0.000000e+00 : f32
    %14 = vector.broadcast %cst_12 : f32 to vector<32x256xf32>
    %15 = arith.maximumf %13, %14 : vector<32x256xf32>
    %c0_13 = arith.constant 0 : index
    %c0_14 = arith.constant 0 : index
    %16 = vector.load %arg7[%c0_13, %c0_14] : memref<36x32xf32, #tpu.memory_space<vmem>>, vector<36x32xf32>
    %cst_15 = arith.constant dense<0.000000e+00> : vector<36x256xf32>
    %17 = tpu.matmul %16, %15, %cst_15 {dimension_numbers = #tpu.dot_dimension_numbers<[1], [0], [0], [1], [0, 0, 1, 1], [], []>} : vector<36x32xf32>, vector<32x256xf32>, vector<36x256xf32> -> vector<36x256xf32>
    %cst_16 = arith.constant 0.000000e+00 : f32
    %18 = vector.broadcast %cst_16 : f32 to vector<4x256xf32>
    %19 = vector.extract_strided_slice %17 {offsets = [0, 0], sizes = [4, 256], strides = [1, 1]} : vector<36x256xf32> to vector<4x256xf32>
    %c17_i32 = arith.constant 17 : i32
    %20 = tpu.dynamic_rotate %19 by %c17_i32 dim 1 : vector<4x256xf32>, i32 -> vector<4x256xf32>
    %c0_17 = arith.constant 0 : index
    %c0_18 = arith.constant 0 : index
    %c0_19 = arith.constant 0 : index
    %21 = vector.load %arg9[%c0_17, %c0_18, %c0_19] : memref<9x1x256xf32, #tpu.memory_space<vmem>>, vector<1x1x256xf32>
    %22 = vector.shape_cast %21 : vector<1x1x256xf32> to vector<1x256xf32>
    %23 = vector.broadcast %22 : vector<1x256xf32> to vector<4x256xf32>
    %24 = arith.mulf %23, %20 : vector<4x256xf32>
    %25 = arith.addf %18, %24 : vector<4x256xf32>
    %26 = vector.extract_strided_slice %17 {offsets = [4, 0], sizes = [4, 256], strides = [1, 1]} : vector<36x256xf32> to vector<4x256xf32>
    %c16_i32 = arith.constant 16 : i32
    %27 = tpu.dynamic_rotate %26 by %c16_i32 dim 1 : vector<4x256xf32>, i32 -> vector<4x256xf32>
    %c1 = arith.constant 1 : index
    %c0_20 = arith.constant 0 : index
    %c0_21 = arith.constant 0 : index
    %28 = vector.load %arg9[%c1, %c0_20, %c0_21] : memref<9x1x256xf32, #tpu.memory_space<vmem>>, vector<1x1x256xf32>
    %29 = vector.shape_cast %28 : vector<1x1x256xf32> to vector<1x256xf32>
    %30 = vector.broadcast %29 : vector<1x256xf32> to vector<4x256xf32>
    %31 = arith.mulf %30, %27 : vector<4x256xf32>
    %32 = arith.addf %25, %31 : vector<4x256xf32>
    %33 = vector.extract_strided_slice %17 {offsets = [8, 0], sizes = [4, 256], strides = [1, 1]} : vector<36x256xf32> to vector<4x256xf32>
    %c15_i32 = arith.constant 15 : i32
    %34 = tpu.dynamic_rotate %33 by %c15_i32 dim 1 : vector<4x256xf32>, i32 -> vector<4x256xf32>
    %c2 = arith.constant 2 : index
    %c0_22 = arith.constant 0 : index
    %c0_23 = arith.constant 0 : index
    %35 = vector.load %arg9[%c2, %c0_22, %c0_23] : memref<9x1x256xf32, #tpu.memory_space<vmem>>, vector<1x1x256xf32>
    %36 = vector.shape_cast %35 : vector<1x1x256xf32> to vector<1x256xf32>
    %37 = vector.broadcast %36 : vector<1x256xf32> to vector<4x256xf32>
    %38 = arith.mulf %37, %34 : vector<4x256xf32>
    %39 = arith.addf %32, %38 : vector<4x256xf32>
    %40 = vector.extract_strided_slice %17 {offsets = [12, 0], sizes = [4, 256], strides = [1, 1]} : vector<36x256xf32> to vector<4x256xf32>
    %c1_i32 = arith.constant 1 : i32
    %41 = tpu.dynamic_rotate %40 by %c1_i32 dim 1 : vector<4x256xf32>, i32 -> vector<4x256xf32>
    %c3 = arith.constant 3 : index
    %c0_24 = arith.constant 0 : index
    %c0_25 = arith.constant 0 : index
    %42 = vector.load %arg9[%c3, %c0_24, %c0_25] : memref<9x1x256xf32, #tpu.memory_space<vmem>>, vector<1x1x256xf32>
    %43 = vector.shape_cast %42 : vector<1x1x256xf32> to vector<1x256xf32>
    %44 = vector.broadcast %43 : vector<1x256xf32> to vector<4x256xf32>
    %45 = arith.mulf %44, %41 : vector<4x256xf32>
    %46 = arith.addf %39, %45 : vector<4x256xf32>
    %47 = vector.extract_strided_slice %17 {offsets = [16, 0], sizes = [4, 256], strides = [1, 1]} : vector<36x256xf32> to vector<4x256xf32>
    %48 = arith.addf %46, %47 : vector<4x256xf32>
    %49 = vector.extract_strided_slice %17 {offsets = [20, 0], sizes = [4, 256], strides = [1, 1]} : vector<36x256xf32> to vector<4x256xf32>
    %c255_i32 = arith.constant 255 : i32
    %50 = tpu.dynamic_rotate %49 by %c255_i32 dim 1 : vector<4x256xf32>, i32 -> vector<4x256xf32>
    %c5 = arith.constant 5 : index
    %c0_26 = arith.constant 0 : index
    %c0_27 = arith.constant 0 : index
    %51 = vector.load %arg9[%c5, %c0_26, %c0_27] : memref<9x1x256xf32, #tpu.memory_space<vmem>>, vector<1x1x256xf32>
    %52 = vector.shape_cast %51 : vector<1x1x256xf32> to vector<1x256xf32>
    %53 = vector.broadcast %52 : vector<1x256xf32> to vector<4x256xf32>
    %54 = arith.mulf %53, %50 : vector<4x256xf32>
    %55 = arith.addf %48, %54 : vector<4x256xf32>
    %56 = vector.extract_strided_slice %17 {offsets = [24, 0], sizes = [4, 256], strides = [1, 1]} : vector<36x256xf32> to vector<4x256xf32>
    %c241_i32 = arith.constant 241 : i32
    %57 = tpu.dynamic_rotate %56 by %c241_i32 dim 1 : vector<4x256xf32>, i32 -> vector<4x256xf32>
    %c6 = arith.constant 6 : index
    %c0_28 = arith.constant 0 : index
    %c0_29 = arith.constant 0 : index
    %58 = vector.load %arg9[%c6, %c0_28, %c0_29] : memref<9x1x256xf32, #tpu.memory_space<vmem>>, vector<1x1x256xf32>
    %59 = vector.shape_cast %58 : vector<1x1x256xf32> to vector<1x256xf32>
    %60 = vector.broadcast %59 : vector<1x256xf32> to vector<4x256xf32>
    %61 = arith.mulf %60, %57 : vector<4x256xf32>
    %62 = arith.addf %55, %61 : vector<4x256xf32>
    %63 = vector.extract_strided_slice %17 {offsets = [28, 0], sizes = [4, 256], strides = [1, 1]} : vector<36x256xf32> to vector<4x256xf32>
    %c240_i32 = arith.constant 240 : i32
    %64 = tpu.dynamic_rotate %63 by %c240_i32 dim 1 : vector<4x256xf32>, i32 -> vector<4x256xf32>
    %c7 = arith.constant 7 : index
    %c0_30 = arith.constant 0 : index
    %c0_31 = arith.constant 0 : index
    %65 = vector.load %arg9[%c7, %c0_30, %c0_31] : memref<9x1x256xf32, #tpu.memory_space<vmem>>, vector<1x1x256xf32>
    %66 = vector.shape_cast %65 : vector<1x1x256xf32> to vector<1x256xf32>
    %67 = vector.broadcast %66 : vector<1x256xf32> to vector<4x256xf32>
    %68 = arith.mulf %67, %64 : vector<4x256xf32>
    %69 = arith.addf %62, %68 : vector<4x256xf32>
    %70 = vector.extract_strided_slice %17 {offsets = [32, 0], sizes = [4, 256], strides = [1, 1]} : vector<36x256xf32> to vector<4x256xf32>
    %c239_i32 = arith.constant 239 : i32
    %71 = tpu.dynamic_rotate %70 by %c239_i32 dim 1 : vector<4x256xf32>, i32 -> vector<4x256xf32>
    %c8 = arith.constant 8 : index
    %c0_32 = arith.constant 0 : index
    %c0_33 = arith.constant 0 : index
    %72 = vector.load %arg9[%c8, %c0_32, %c0_33] : memref<9x1x256xf32, #tpu.memory_space<vmem>>, vector<1x1x256xf32>
    %73 = vector.shape_cast %72 : vector<1x1x256xf32> to vector<1x256xf32>
    %74 = vector.broadcast %73 : vector<1x256xf32> to vector<4x256xf32>
    %75 = arith.mulf %74, %71 : vector<4x256xf32>
    %76 = arith.addf %69, %75 : vector<4x256xf32>
    %c0_34 = arith.constant 0 : index
    %c0_35 = arith.constant 0 : index
    %77 = vector.load %arg8[%c0_34, %c0_35] : memref<4x1xf32, #tpu.memory_space<vmem>>, vector<4x1xf32>
    %78 = vector.broadcast %77 : vector<4x1xf32> to vector<4x256xf32>
    %79 = arith.addf %76, %78 : vector<4x256xf32>
    %80 = vector.extract_strided_slice %79 {offsets = [0, 0], sizes = [2, 256], strides = [1, 1]} : vector<4x256xf32> to vector<2x256xf32>
    %81 = vector.extract_strided_slice %79 {offsets = [2, 0], sizes = [2, 256], strides = [1, 1]} : vector<4x256xf32> to vector<2x256xf32>
    %cst_36 = arith.constant 2.000000e+00 : f32
    %82 = vector.broadcast %cst_36 : f32 to vector<2x256xf32>
    %83 = arith.addf %81, %82 : vector<2x256xf32>
    %84 = arith.negf %83 : vector<2x256xf32>
    %85 = math.exp %84 : vector<2x256xf32>
    %cst_37 = arith.constant 1.000000e+00 : f32
    %86 = vector.broadcast %cst_37 : f32 to vector<2x256xf32>
    %87 = arith.addf %86, %85 : vector<2x256xf32>
    %88 = arith.divf %86, %87 : vector<2x256xf32>
    %c0_38 = arith.constant 0 : index
    %c0_39 = arith.constant 0 : index
    %c0_40 = arith.constant 0 : index
    %89 = vector.load %arg2[%c0_38, %c0_39, %c0_40] : memref<1x2x256xf32, #tpu.memory_space<vmem>>, vector<1x2x256xf32>
    %90 = vector.shape_cast %89 : vector<1x2x256xf32> to vector<2x256xf32>
    %91 = arith.mulf %90, %88 : vector<2x256xf32>
    %92 = arith.addf %91, %80 : vector<2x256xf32>
    %c0_41 = arith.constant 0 : index
    %c0_42 = arith.constant 0 : index
    %c0_43 = arith.constant 0 : index
    %93 = vector.load %arg10[%c0_41, %c0_42, %c0_43] : memref<1x2x256xf32, #tpu.memory_space<vmem>>, vector<1x2x256xf32>
    %94 = vector.shape_cast %93 : vector<1x2x256xf32> to vector<2x256xf32>
    %95 = vector.shape_cast %92 : vector<2x256xf32> to vector<1x2x256xf32>
    tpu.vector_store %arg10[%c0_41, %c0_42, %c0_43], %95 {strides = array<i32>} : memref<1x2x256xf32, #tpu.memory_space<vmem>>, vector<1x2x256xf32>,
    %cst_44 = arith.constant 0.000000e+00 : f32
    %96 = vector.broadcast %cst_44 : f32 to vector<2x256xf32>
    %97 = arith.subf %96, %83 : vector<2x256xf32>
    %cst_45 = arith.constant 0.000000e+00 : f32
    %98 = vector.broadcast %cst_45 : f32 to vector<2x256xf32>
    %99 = arith.maximumf %97, %98 : vector<2x256xf32>
    %100 = math.absf %97 : vector<2x256xf32>
    %cst_46 = arith.constant 0.000000e+00 : f32
    %101 = vector.broadcast %cst_46 : f32 to vector<2x256xf32>
    %102 = arith.subf %101, %100 : vector<2x256xf32>
    %103 = math.exp %102 : vector<2x256xf32>
    %cst_47 = arith.constant 1.000000e+00 : f32
    %104 = vector.broadcast %cst_47 : f32 to vector<2x256xf32>
    %105 = arith.addf %104, %103 : vector<2x256xf32>
    %106 = math.log %105 : vector<2x256xf32>
    %107 = arith.addf %99, %106 : vector<2x256xf32>
    %cst_48 = arith.constant 0.000000e+00 : f32
    %108 = vector.broadcast %cst_48 : f32 to vector<2x256xf32>
    %109 = arith.subf %108, %107 : vector<2x256xf32>
    %cst_49 = arith.constant dense<0.000000e+00> : vector<2xf32>
    %110 = vector.multi_reduction <add>, %109, %cst_49 [1] : vector<2x256xf32> to vector<2xf32>
    %111 = vector.shape_cast %110 : vector<2xf32> to vector<2x1xf32>
    %cst_50 = arith.constant dense<0.000000e+00> : vector<1xf32>
    %112 = vector.multi_reduction <add>, %111, %cst_50 [0] : vector<2x1xf32> to vector<1xf32>
    %113 = vector.shape_cast %112 : vector<1xf32> to vector<1x1xf32>
    %c0_51 = arith.constant 0 : index
    %c0_52 = arith.constant 0 : index
    %c0_53 = arith.constant 0 : index
    %114 = vector.load %arg11[%c0_51, %c0_52, %c0_53] : memref<1x1x1xf32, #tpu.memory_space<vmem>>, vector<1x1x1xf32>
    %115 = vector.shape_cast %114 : vector<1x1x1xf32> to vector<1x1xf32>
    %116 = vector.shape_cast %113 : vector<1x1xf32> to vector<1x1x1xf32>
    tpu.vector_store %arg11[%c0_51, %c0_52, %c0_53], %116 {strides = array<i32>} : memref<1x1x1xf32, #tpu.memory_space<vmem>>, vector<1x1x1xf32>,
    return
  }
  func.func @transform_0(%arg0: i32) -> (i32, i32, i32) {
    %c0_i32 = arith.constant 0 : i32
    %c0_i32_0 = arith.constant 0 : i32
    %c0_i32_1 = arith.constant 0 : i32
    return %arg0, %c0_i32, %c0_i32_0 : i32, i32, i32
  }
  func.func @transform_1(%arg0: i32) -> (i32, i32, i32) {
    %c0_i32 = arith.constant 0 : i32
    %c0_i32_0 = arith.constant 0 : i32
    %c0_i32_1 = arith.constant 0 : i32
    return %arg0, %c0_i32, %c0_i32_0 : i32, i32, i32
  }
  func.func @transform_2(%arg0: i32) -> (i32, i32) {
    %c0_i32 = arith.constant 0 : i32
    %c0_i32_0 = arith.constant 0 : i32
    %c0_i32_1 = arith.constant 0 : i32
    return %c0_i32, %c0_i32_0 : i32, i32
  }
  func.func @transform_3(%arg0: i32) -> (i32, i32) {
    %c0_i32 = arith.constant 0 : i32
    %c0_i32_0 = arith.constant 0 : i32
    %c0_i32_1 = arith.constant 0 : i32
    return %c0_i32, %c0_i32_0 : i32, i32
  }
  func.func @transform_4(%arg0: i32) -> (i32, i32) {
    %c0_i32 = arith.constant 0 : i32
    %c0_i32_0 = arith.constant 0 : i32
    %c0_i32_1 = arith.constant 0 : i32
    return %c0_i32, %c0_i32_0 : i32, i32
  }
  func.func @transform_5(%arg0: i32) -> (i32, i32) {
    %c0_i32 = arith.constant 0 : i32
    %c0_i32_0 = arith.constant 0 : i32
    %c0_i32_1 = arith.constant 0 : i32
    return %c0_i32, %c0_i32_0 : i32, i32
  }
  func.func @transform_6(%arg0: i32) -> (i32, i32) {
    %c0_i32 = arith.constant 0 : i32
    %c0_i32_0 = arith.constant 0 : i32
    %c0_i32_1 = arith.constant 0 : i32
    return %c0_i32, %c0_i32_0 : i32, i32
  }
  func.func @transform_7(%arg0: i32) -> (i32, i32) {
    %c0_i32 = arith.constant 0 : i32
    %c0_i32_0 = arith.constant 0 : i32
    %c0_i32_1 = arith.constant 0 : i32
    return %c0_i32, %c0_i32_0 : i32, i32
  }
  func.func @transform_8(%arg0: i32) -> (i32, i32, i32) {
    %c0_i32 = arith.constant 0 : i32
    %c0_i32_0 = arith.constant 0 : i32
    %c0_i32_1 = arith.constant 0 : i32
    %c0_i32_2 = arith.constant 0 : i32
    return %c0_i32, %c0_i32_0, %c0_i32_1 : i32, i32, i32
  }
  func.func @transform_9(%arg0: i32) -> (i32, i32, i32) {
    %c0_i32 = arith.constant 0 : i32
    %c0_i32_0 = arith.constant 0 : i32
    %c0_i32_1 = arith.constant 0 : i32
    return %arg0, %c0_i32, %c0_i32_0 : i32, i32, i32
  }
  func.func @transform_10(%arg0: i32) -> (i32, i32, i32) {
    %c0_i32 = arith.constant 0 : i32
    %c0_i32_0 = arith.constant 0 : i32
    %c0_i32_1 = arith.constant 0 : i32
    return %arg0, %c0_i32, %c0_i32_0 : i32, i32, i32
  }
}

</mosaic_0001>

<llo_original>
// kernel: affine_coupling_forward.1
$region0: #{affine_coupling_forward.1}
  #allocation0 [shape = 'u32[]', space=smem, size = 0x4, offset = 0x4, fixed_abs, tag = 'smem constant byte address 0x4 - core index']
  #allocation1 [shape = 'u32[144,128]{1,0:T(1,128)}', space=vmem, size = 0x12000, scoped, tag = 'internal scratch']
  %s0 = inlined_call_operand.vmem [shape: f32[2,18,256], index: 0, kind: input, shape index: {}]
  %s1 = inlined_call_operand.vmem [shape: f32[2,2,256], index: 1, kind: input, shape index: {}]
  %s2 = inlined_call_operand.vmem [shape: f32[32,18], index: 2, kind: input, shape index: {}]
  %s3 = inlined_call_operand.vmem [shape: f32[32,1], index: 3, kind: input, shape index: {}]
  %s4 = inlined_call_operand.vmem [shape: f32[32,32], index: 4, kind: input, shape index: {}]
  %s5 = inlined_call_operand.vmem [shape: f32[32,1], index: 5, kind: input, shape index: {}]
  %s6 = inlined_call_operand.vmem [shape: f32[36,32], index: 6, kind: input, shape index: {}]
  %s7 = inlined_call_operand.vmem [shape: f32[4,1], index: 7, kind: input, shape index: {}]
  %s8 = inlined_call_operand.vmem [shape: f32[9,1,256], index: 8, kind: input, shape index: {}]
  %s9 = inlined_call_operand.vmem [shape: f32[2,2,256], index: 9, kind: output, shape index: {0}]
  %s10 = inlined_call_operand.vmem [shape: f32[2,1,1], index: 10, kind: output, shape index: {1}]
  %11 = xla_tuple %s9, %s10
  %s12 = sld [smem:[#allocation0]]
  $region77: #{affine_coupling_forward.1} parent=0
    _
  %s14 = ssub.s32 1, %s12
  %s15 = scalar_select 0, %s14, %s12
  loop: start=0, step=1, limit=4
  $region2: #{affine_coupling_forward.1} parent=0 // loop_pre_header
    _
  $region3: #{affine_coupling_forward.1} parent=0 // loop_header
    %s17 = sphi 0, %s21
    %p18 = scmp.ge.s32.totalorder %s17, 4
    %s27 = sphi 0, %s29
    %s30 = sphi 0, %s27
    %s31 = sphi 0, %s30
    %s47 = sphi 0, %s31
    %s53 = sphi 0, %s55
    %s56 = sphi 0, %s53
    %s57 = sphi 0, %s56
    %s73 = sphi 0, %s57
    %s77 = sphi 0, %s77
    %s79 = sphi 0, %s77
    %s80 = sphi 0, %s79
    %s94 = sphi 0, %s80
    %s98 = sphi 0, %s98
    %s100 = sphi 0, %s98
    %s101 = sphi 0, %s100
    %s115 = sphi 0, %s101
    %s119 = sphi 0, %s119
    %s121 = sphi 0, %s119
    %s122 = sphi 0, %s121
    %s136 = sphi 0, %s122
    %s140 = sphi 0, %s140
    %s142 = sphi 0, %s140
    %s143 = sphi 0, %s142
    %s157 = sphi 0, %s143
    %s161 = sphi 0, %s161
    %s163 = sphi 0, %s161
    %s164 = sphi 0, %s163
    %s178 = sphi 0, %s164
    %s182 = sphi 0, %s182
    %s184 = sphi 0, %s182
    %s185 = sphi 0, %s184
    %s199 = sphi 0, %s185
    %s203 = sphi 0, %s203
    %s205 = sphi 0, %s203
    %s206 = sphi 0, %s205
    %s220 = sphi 0, %s206
    %s226 = sphi 0, %s228
    %s229 = sphi 0, %s226
    %s230 = sphi 0, %s229
    %s246 = sphi 0, %s230
    %s252 = sphi 0, %s254
    %s255 = sphi 0, %s252
    %s256 = sphi 0, %s255
    %s272 = sphi 0, %s256
  $region4: #{affine_coupling_forward.1} parent=0 // loop_header_branch
    %20 = sbr.rel (%p18) target = $region8
  $region5: #{affine_coupling_forward.1} parent=0 // loop_body
    %s22 = ssub.s32 %s17, 1
    %s23 = ssub.s32 %s17, 2
    %s24 = sadd.s32 %s17, 1
    %s25 = ssub.s32 %s17, %s24
    %p26 = scmp.eq.s32.totalorder %s25, 0
    %s28 = sadd.s32 %s27, 1
    %s29 = scalar_select %p26, %s27, %s28
    %p32 = pneg %p26
    %p33 = scmp.eq.s32.totalorder %s17, 1
    %p34 = por %p32, %p33
    %p35 = scmp.ne.s32.totalorder %s27, %s30
    %p36 = scmp.eq.s32.totalorder %s17, 0
    %p37 = por %p35, %p36
    %p38 = scmp.ne.s32.totalorder %s27, %s30
    %p39 = scmp.eq.s32.totalorder %s22, 1
    %p40 = por %p38, %p39
    %p41 = scmp.ne.s32.totalorder %s30, %s31
    %p42 = scmp.eq.s32.totalorder %s22, 0
    %p43 = por %p41, %p42
    %p44 = scmp.ne.s32.totalorder %s30, %s31
    %p45 = scmp.eq.s32.totalorder %s23, 1
    %p46 = por %p44, %p45
    %p48 = scmp.ne.s32.totalorder %s31, %s47
    %p49 = scmp.eq.s32.totalorder %s23, 0
    %p50 = por %p48, %p49
    %s51 = ssub.s32 %s17, %s24
    %p52 = scmp.eq.s32.totalorder %s51, 0
    %s54 = sadd.s32 %s53, 1
    %s55 = scalar_select %p52, %s53, %s54
    %p58 = pneg %p52
    %p59 = scmp.eq.s32.totalorder %s17, 1
    %p60 = por %p58, %p59
    %p61 = scmp.ne.s32.totalorder %s53, %s56
    %p62 = scmp.eq.s32.totalorder %s17, 0
    %p63 = por %p61, %p62
    %p64 = scmp.ne.s32.totalorder %s53, %s56
    %p65 = scmp.eq.s32.totalorder %s22, 1
    %p66 = por %p64, %p65
    %p67 = scmp.ne.s32.totalorder %s56, %s57
    %p68 = scmp.eq.s32.totalorder %s22, 0
    %p69 = por %p67, %p68
    %p70 = scmp.ne.s32.totalorder %s56, %s57
    %p71 = scmp.eq.s32.totalorder %s23, 1
    %p72 = por %p70, %p71
    %p74 = scmp.ne.s32.totalorder %s57, %s73
    %p75 = scmp.eq.s32.totalorder %s23, 0
    %p76 = por %p74, %p75
    %s78 = sadd.s32 %s77, 1
    %p81 = scmp.eq.s32.totalorder %s17, 1
    %p82 = scmp.ne.s32.totalorder %s77, %s79
    %p83 = scmp.eq.s32.totalorder %s17, 0
    %p84 = por %p82, %p83
    %p85 = scmp.ne.s32.totalorder %s77, %s79
    %p86 = scmp.eq.s32.totalorder %s22, 1
    %p87 = por %p85, %p86
    %p88 = scmp.ne.s32.totalorder %s79, %s80
    %p89 = scmp.eq.s32.totalorder %s22, 0
    %p90 = por %p88, %p89
    %p91 = scmp.ne.s32.totalorder %s79, %s80
    %p92 = scmp.eq.s32.totalorder %s23, 1
    %p93 = por %p91, %p92
    %p95 = scmp.ne.s32.totalorder %s80, %s94
    %p96 = scmp.eq.s32.totalorder %s23, 0
    %p97 = por %p95, %p96
    %s99 = sadd.s32 %s98, 1
    %p102 = scmp.eq.s32.totalorder %s17, 1
    %p103 = scmp.ne.s32.totalorder %s98, %s100
    %p104 = scmp.eq.s32.totalorder %s17, 0
    %p105 = por %p103, %p104
    %p106 = scmp.ne.s32.totalorder %s98, %s100
    %p107 = scmp.eq.s32.totalorder %s22, 1
    %p108 = por %p106, %p107
    %p109 = scmp.ne.s32.totalorder %s100, %s101
    %p110 = scmp.eq.s32.totalorder %s22, 0
    %p111 = por %p109, %p110
    %p112 = scmp.ne.s32.totalorder %s100, %s101
    %p113 = scmp.eq.s32.totalorder %s23, 1
    %p114 = por %p112, %p113
    %p116 = scmp.ne.s32.totalorder %s101, %s115
    %p117 = scmp.eq.s32.totalorder %s23, 0
    %p118 = por %p116, %p117
    %s120 = sadd.s32 %s119, 1
    %p123 = scmp.eq.s32.totalorder %s17, 1
    %p124 = scmp.ne.s32.totalorder %s119, %s121
    %p125 = scmp.eq.s32.totalorder %s17, 0
    %p126 = por %p124, %p125
    %p127 = scmp.ne.s32.totalorder %s119, %s121
    %p128 = scmp.eq.s32.totalorder %s22, 1
    %p129 = por %p127, %p128
    %p130 = scmp.ne.s32.totalorder %s121, %s122
    %p131 = scmp.eq.s32.totalorder %s22, 0
    %p132 = por %p130, %p131
    %p133 = scmp.ne.s32.totalorder %s121, %s122
    %p134 = scmp.eq.s32.totalorder %s23, 1
    %p135 = por %p133, %p134
    %p137 = scmp.ne.s32.totalorder %s122, %s136
    %p138 = scmp.eq.s32.totalorder %s23, 0
    %p139 = por %p137, %p138
    %s141 = sadd.s32 %s140, 1
    %p144 = scmp.eq.s32.totalorder %s17, 1
    %p145 = scmp.ne.s32.totalorder %s140, %s142
    %p146 = scmp.eq.s32.totalorder %s17, 0
    %p147 = por %p145, %p146
    %p148 = scmp.ne.s32.totalorder %s140, %s142
    %p149 = scmp.eq.s32.totalorder %s22, 1
    %p150 = por %p148, %p149
    %p151 = scmp.ne.s32.totalorder %s142, %s143
    %p152 = scmp.eq.s32.totalorder %s22, 0
    %p153 = por %p151, %p152
    %p154 = scmp.ne.s32.totalorder %s142, %s143
    %p155 = scmp.eq.s32.totalorder %s23, 1
    %p156 = por %p154, %p155
    %p158 = scmp.ne.s32.totalorder %s143, %s157
    %p159 = scmp.eq.s32.totalorder %s23, 0
    %p160 = por %p158, %p159
    %s162 = sadd.s32 %s161, 1
    %p165 = scmp.eq.s32.totalorder %s17, 1
    %p166 = scmp.ne.s32.totalorder %s161, %s163
    %p167 = scmp.eq.s32.totalorder %s17, 0
    %p168 = por %p166, %p167
    %p169 = scmp.ne.s32.totalorder %s161, %s163
    %p170 = scmp.eq.s32.totalorder %s22, 1
    %p171 = por %p169, %p170
    %p172 = scmp.ne.s32.totalorder %s163, %s164
    %p173 = scmp.eq.s32.totalorder %s22, 0
    %p174 = por %p172, %p173
    %p175 = scmp.ne.s32.totalorder %s163, %s164
    %p176 = scmp.eq.s32.totalorder %s23, 1
    %p177 = por %p175, %p176
    %p179 = scmp.ne.s32.totalorder %s164, %s178
    %p180 = scmp.eq.s32.totalorder %s23, 0
    %p181 = por %p179, %p180
    %s183 = sadd.s32 %s182, 1
    %p186 = scmp.eq.s32.totalorder %s17, 1
    %p187 = scmp.ne.s32.totalorder %s182, %s184
    %p188 = scmp.eq.s32.totalorder %s17, 0
    %p189 = por %p187, %p188
    %p190 = scmp.ne.s32.totalorder %s182, %s184
    %p191 = scmp.eq.s32.totalorder %s22, 1
    %p192 = por %p190, %p191
    %p193 = scmp.ne.s32.totalorder %s184, %s185
    %p194 = scmp.eq.s32.totalorder %s22, 0
    %p195 = por %p193, %p194
    %p196 = scmp.ne.s32.totalorder %s184, %s185
    %p197 = scmp.eq.s32.totalorder %s23, 1
    %p198 = por %p196, %p197
    %p200 = scmp.ne.s32.totalorder %s185, %s199
    %p201 = scmp.eq.s32.totalorder %s23, 0
    %p202 = por %p200, %p201
    %s204 = sadd.s32 %s203, 1
    %p207 = scmp.eq.s32.totalorder %s17, 1
    %p208 = scmp.ne.s32.totalorder %s203, %s205
    %p209 = scmp.eq.s32.totalorder %s17, 0
    %p210 = por %p208, %p209
    %p211 = scmp.ne.s32.totalorder %s203, %s205
    %p212 = scmp.eq.s32.totalorder %s22, 1
    %p213 = por %p211, %p212
    %p214 = scmp.ne.s32.totalorder %s205, %s206
    %p215 = scmp.eq.s32.totalorder %s22, 0
    %p216 = por %p214, %p215
    %p217 = scmp.ne.s32.totalorder %s205, %s206
    %p218 = scmp.eq.s32.totalorder %s23, 1
    %p219 = por %p217, %p218
    %p221 = scmp.ne.s32.totalorder %s206, %s220
    %p222 = scmp.eq.s32.totalorder %s23, 0
    %p223 = por %p221, %p222
    %s224 = ssub.s32 %s17, %s24
    %p225 = scmp.eq.s32.totalorder %s224, 0
    %s227 = sadd.s32 %s226, 1
    %s228 = scalar_select %p225, %s226, %s227
    %p231 = pneg %p225
    %p232 = scmp.eq.s32.totalorder %s17, 1
    %p233 = por %p231, %p232
    %p234 = scmp.ne.s32.totalorder %s226, %s229
    %p235 = scmp.eq.s32.totalorder %s17, 0
    %p236 = por %p234, %p235
    %p237 = scmp.ne.s32.totalorder %s226, %s229
    %p238 = scmp.eq.s32.totalorder %s22, 1
    %p239 = por %p237, %p238
    %p240 = scmp.ne.s32.totalorder %s229, %s230
    %p241 = scmp.eq.s32.totalorder %s22, 0
    %p242 = por %p240, %p241
    %p243 = scmp.ne.s32.totalorder %s229, %s230
    %p244 = scmp.eq.s32.totalorder %s23, 1
    %p245 = por %p243, %p244
    %p247 = scmp.ne.s32.totalorder %s230, %s246
    %p248 = scmp.eq.s32.totalorder %s23, 0
    %p249 = por %p247, %p248
    %s250 = ssub.s32 %s17, %s24
    %p251 = scmp.eq.s32.totalorder %s250, 0
    %s253 = sadd.s32 %s252, 1
    %s254 = scalar_select %p251, %s252, %s253
    %p257 = pneg %p251
    %p258 = scmp.eq.s32.totalorder %s17, 1
    %p259 = por %p257, %p258
    %p260 = scmp.ne.s32.totalorder %s252, %s255
    %p261 = scmp.eq.s32.totalorder %s17, 0
    %p262 = por %p260, %p261
    %p263 = scmp.ne.s32.totalorder %s252, %s255
    %p264 = scmp.eq.s32.totalorder %s22, 1
    %p265 = por %p263, %p264
    %p266 = scmp.ne.s32.totalorder %s255, %s256
    %p267 = scmp.eq.s32.totalorder %s22, 0
    %p268 = por %p266, %p267
    %p269 = scmp.ne.s32.totalorder %s255, %s256
    %p270 = scmp.eq.s32.totalorder %s23, 1
    %p271 = por %p269, %p270
    %p273 = scmp.ne.s32.totalorder %s256, %s272
    %p274 = scmp.eq.s32.totalorder %s23, 0
    %p275 = por %p273, %p274
    %p276 = scmp.le.s32.totalorder 1, %s17
    %p277 = scmp.lt.s32.totalorder %s17, 3
    %p278 = pnand %p276, %p277
    %p279 = pneg %p278
    // Predicated region
    $region9: #{affine_coupling_forward.1} parent=5 // pred_check
      _
    $region10: #{affine_coupling_forward.1} parent=5 // pred_check_branch
      %281 = sbr.rel (%p278) target = $region12
    $region11: #{affine_coupling_forward.1} parent=5 // pred_region
      %s282 = ssub.s32 %s17, 1
      // Predicated region
      $region13: #{affine_coupling_forward.1} parent=11 // pred_check
        %p283 = pneg %p90
      $region14: #{affine_coupling_forward.1} parent=11 // pred_check_branch
        %285 = sbr.rel (%p283) target = $region16
      $region15: #{affine_coupling_forward.1} parent=11 // pred_region
        _
      $region16: #{affine_coupling_forward.1} parent=11 // pred_fallthru
        _
      // Predicated region
      $region17: #{affine_coupling_forward.1} parent=11 // pred_check
        %p286 = pneg %p111
      $region18: #{affine_coupling_forward.1} parent=11 // pred_check_branch
        %288 = sbr.rel (%p286) target = $region20
      $region19: #{affine_coupling_forward.1} parent=11 // pred_region
        _
      $region20: #{affine_coupling_forward.1} parent=11 // pred_fallthru
        _
      // Predicated region
      $region21: #{affine_coupling_forward.1} parent=11 // pred_check
        %p289 = pneg %p132
      $region22: #{affine_coupling_forward.1} parent=11 // pred_check_branch
        %291 = sbr.rel (%p289) target = $region24
      $region23: #{affine_coupling_forward.1} parent=11 // pred_region
        _
      $region24: #{affine_coupling_forward.1} parent=11 // pred_fallthru
        _
      // Predicated region
      $region25: #{affine_coupling_forward.1} parent=11 // pred_check
        %p292 = pneg %p153
      $region26: #{affine_coupling_forward.1} parent=11 // pred_check_branch
        %294 = sbr.rel (%p292) target = $region28
      $region27: #{affine_coupling_forward.1} parent=11 // pred_region
        _
      $region28: #{affine_coupling_forward.1} parent=11 // pred_fallthru
        _
      // Predicated region
      $region29: #{affine_coupling_forward.1} parent=11 // pred_check
        %p295 = pneg %p174
      $region30: #{affine_coupling_forward.1} parent=11 // pred_check_branch
        %297 = sbr.rel (%p295) target = $region32
      $region31: #{affine_coupling_forward.1} parent=11 // pred_region
        _
      $region32: #{affine_coupling_forward.1} parent=11 // pred_fallthru
        _
      // Predicated region
      $region33: #{affine_coupling_forward.1} parent=11 // pred_check
        %p298 = pneg %p195
      $region34: #{affine_coupling_forward.1} parent=11 // pred_check_branch
        %300 = sbr.rel (%p298) target = $region36
      $region35: #{affine_coupling_forward.1} parent=11 // pred_region
        _
      $region36: #{affine_coupling_forward.1} parent=11 // pred_fallthru
        _
      // Predicated region
      $region37: #{affine_coupling_forward.1} parent=11 // pred_check
        %p301 = pneg %p216
      $region38: #{affine_coupling_forward.1} parent=11 // pred_check_branch
        %303 = sbr.rel (%p301) target = $region40
      $region39: #{affine_coupling_forward.1} parent=11 // pred_region
        _
      $region40: #{affine_coupling_forward.1} parent=11 // pred_fallthru
        _
    $region12: #{affine_coupling_forward.1} parent=5 // pred_fallthru
      _
    %p304 = scmp.lt.s32.totalorder %s17, 2
    // Predicated region
    $region41: #{affine_coupling_forward.1} parent=5 // pred_check
      %p305 = pneg %p304
    $region42: #{affine_coupling_forward.1} parent=5 // pred_check_branch
      %307 = sbr.rel (%p305) target = $region44
    $region43: #{affine_coupling_forward.1} parent=5 // pred_region
      // Predicated region
      $region45: #{affine_coupling_forward.1} parent=43 // pred_check
        %p308 = pneg %p37
      $region46: #{affine_coupling_forward.1} parent=43 // pred_check_branch
        %310 = sbr.rel (%p308) target = $region48
      $region47: #{affine_coupling_forward.1} parent=43 // pred_region
        %p311 = scmp.lt.s32.totalorder %s17, 1
        %s312 = scalar_select %p311, %s17, 1
        %s313 = smul.addr %s312, 6
        %s314 = smul.addr %s313, 8
        %s315 = scalar_lea.vmem %s0, %s314
      $region48: #{affine_coupling_forward.1} parent=43 // pred_fallthru
        _
      // Predicated region
      $region49: #{affine_coupling_forward.1} parent=43 // pred_check
        %p316 = pneg %p63
      $region50: #{affine_coupling_forward.1} parent=43 // pred_check_branch
        %318 = sbr.rel (%p316) target = $region52
      $region51: #{affine_coupling_forward.1} parent=43 // pred_region
        %p319 = scmp.lt.s32.totalorder %s17, 1
        %s320 = scalar_select %p319, %s17, 1
        %s321 = smul.addr %s320, 2
        %s322 = smul.addr %s321, 2
        %s323 = scalar_lea.vmem %s1, %s322
      $region52: #{affine_coupling_forward.1} parent=43 // pred_fallthru
        _
    $region44: #{affine_coupling_forward.1} parent=5 // pred_fallthru
      _
    %p324 = scmp.le.s32.totalorder 1, %s17
    %p325 = scmp.lt.s32.totalorder %s17, 3
    %p326 = pnand %p324, %p325
    %p327 = pneg %p326
    // Predicated region
    $region53: #{affine_coupling_forward.1} parent=5 // pred_check
      _
    $region54: #{affine_coupling_forward.1} parent=5 // pred_check_branch
      %329 = sbr.rel (%p326) target = $region56
    $region55: #{affine_coupling_forward.1} parent=5 // pred_region
      %s330 = ssub.s32 %s17, 1
      %p331 = scmp.lt.s32.totalorder %s22, 1
      %s332 = scalar_select %p331, %s22, 1
      %s333 = smul.addr %s332, 6
      %s334 = smul.addr %s333, 8
      %s335 = scalar_lea.vmem %s0, %s334
      %p336 = pneg %p43
      %p337 = pneg %p40
      %p338 = scmp.lt.s32.totalorder %s22, 1
      %s339 = scalar_select %p338, %s22, 1
      %s340 = smul.addr %s339, 2
      %s341 = smul.addr %s340, 2
      %s342 = scalar_lea.vmem %s1, %s341
      %p343 = pneg %p69
      %p344 = pneg %p66
      %p345 = pneg %p90
      %p346 = pneg %p87
      %p347 = pneg %p111
      %p348 = pneg %p108
      %p349 = pneg %p132
      %p350 = pneg %p129
      %p351 = pneg %p153
      %p352 = pneg %p150
      %p353 = pneg %p174
      %p354 = pneg %p171
      %p355 = pneg %p195
      %p356 = pneg %p192
      %p357 = pneg %p216
      %p358 = pneg %p213
      %p359 = pneg %p242
      %p360 = pneg %p239
      %p361 = scmp.lt.s32.totalorder %s22, 1
      %s362 = scalar_select %p361, %s22, 1
      %s363 = smul.addr %s362, 2
      %s364 = smul.addr %s363, 2
      %s365 = scalar_lea.vmem %s9, %s364
      %p366 = pneg %p268
      %p367 = pneg %p265
      %p368 = scmp.lt.s32.totalorder %s22, 1
      %s369 = scalar_select %p368, %s22, 1
      %s370 = scalar_lea.vmem %s10, %s369
      %p371 = scmp.lt.s32.totalorder %s22, 1
      %s372 = scalar_select %p371, %s22, 1
      %s373 = smul.addr %s372, 6
      %s374 = smul.addr %s373, 8
      %s375 = scalar_lea.vmem %s0, %s374
      %p376 = scmp.lt.s32.totalorder %s22, 1
      %s377 = scalar_select %p376, %s22, 1
      %s378 = smul.addr %s377, 2
      %s379 = smul.addr %s378, 2
      %s380 = scalar_lea.vmem %s1, %s379
      %p381 = scmp.lt.s32.totalorder %s22, 1
      %s382 = scalar_select %p381, %s22, 1
      %s383 = smul.addr %s382, 2
      %s384 = smul.addr %s383, 2
      %s385 = scalar_lea.vmem %s9, %s384
      %p386 = scmp.lt.s32.totalorder %s22, 1
      %s387 = scalar_select %p386, %s22, 1
      %s388 = scalar_lea.vmem %s10, %s387
      %v389 = vld [vmem:[%s2] sm:$0xff]
      %v390 = vld [vmem:[%s2 + $0x8] sm:$0xff]
      %v391 = vld [vmem:[%s2 + $0x10] sm:$0xff]
      %v392 = vld [vmem:[%s2 + $0x18] sm:$0xff]
      %v393 = vld [vmem:[%s375] sm:$0xff]
      %v394 = vld [vmem:[%s375 + $0x8] sm:$0xff]
      %v395 = vld [vmem:[%s375 + $0x10] sm:$0xff]
      %v396 = vld [vmem:[%s375 + $0x18] sm:$0xff]
      %v397 = vld [vmem:[%s375 + $0x20] sm:$0x3]
      %v398 = vld [vmem:[%s375 + $0x28] sm:$0x3]
      %v399 = vld [vmem:[%s3] sm:$0xff]
      %v400 = vld [vmem:[%s3 + $0x8] sm:$0xff]
      %v401 = vld [vmem:[%s3 + $0x10] sm:$0xff]
      %v402 = vld [vmem:[%s3 + $0x18] sm:$0xff]
      %404 = vset.pattern.permute.xlu0 0
      %405 = vperm.xlu0 %404, %v399
      %v406 = vpop.permute.xlu0 %405
      %409 = vset.pattern.permute.xlu0 0
      %410 = vperm.xlu0 %409, %v400
      %v411 = vpop.permute.xlu0 %410
      %414 = vset.pattern.permute.xlu0 0
      %415 = vperm.xlu0 %414, %v401
      %v416 = vpop.permute.xlu0 %415
      %419 = vset.pattern.permute.xlu0 0
      %420 = vperm.xlu0 %419, %v402
      %v421 = vpop.permute.xlu0 %420
      %vm423 = vcmask 146432
      %v425 = vsel %vm423, %v389, 0
      %v428 = vsel %vm423, %v390, 0
      %v431 = vsel %vm423, %v391, 0
      %v434 = vsel %vm423, %v392, 0
      %vm436 = vcmask 1041408
      %v438 = vsel %vm436, %v397, 0
      %v441 = vsel %vm436, %v398, 0
      %443 = vmatprep.subr.mxu0 %v394
      %444 = vmatpush1.msra.mxu0 %v393
      %445 = vmatprep.subr.mxu0 %v396
      %446 = vmatpush1.msra.mxu0 %v395
      %447 = vmatprep.subr.mxu0 %v441
      %448 = vmatpush1.msra.mxu0 %v438
      %449 = vmatprep.subr.mxu0 0.0
      %450 = vmatpush1.msra.mxu0 0.0
      %451 = vmatprep.subr.mxu0 0.0
      %452 = vmatpush1.msra.mxu0 0.0
      %453 = vmatprep.subr.mxu0 0.0
      %454 = vmatpush1.msra.mxu0 0.0
      %455 = vmatprep.subr.mxu0 0.0
      %456 = vmatpush1.msra.mxu0 0.0
      %457 = vmatprep.subr.mxu0 0.0
      %458 = vmatpush1.msra.mxu0 0.0
      %459 = vmatprep.subr.mxu0 0.0
      %460 = vmatpush1.msra.mxu0 0.0
      %461 = vmatprep.subr.mxu0 0.0
      %462 = vmatpush1.msra.mxu0 0.0
      %463 = vmatprep.subr.mxu0 0.0
      %464 = vmatpush1.msra.mxu0 0.0
      %465 = vmatprep.subr.mxu0 0.0
      %466 = vmatpush1.msra.mxu0 0.0
      %467 = vmatprep.subr.mxu0 0.0
      %468 = vmatpush1.msra.mxu0 0.0
      %469 = vmatprep.subr.mxu0 0.0
      %470 = vmatpush1.msra.mxu0 0.0
      %471 = vmatprep.subr.mxu0 0.0
      %472 = vmatpush1.msra.mxu0 0.0
      %473 = vmatprep.subr.mxu0 0.0
      %474 = vmatpush1.msra.mxu0 0.0
      %475 = vmatprep.subr.mxu0 0.0
      %476 = vmatpush1.msra.mxu0 0.0
      %477 = vmatprep.subr.mxu0 0.0
      %478 = vmatpush1.msra.mxu0 0.0
      %479 = vmatprep.subr.mxu0 0.0
      %480 = vmatpush1.msra.mxu0 0.0
      %481 = vmatprep.subr.mxu0 0.0
      %482 = vmatpush1.msra.mxu0 0.0
      %483 = vmatprep.subr.mxu0 0.0
      %484 = vmatpush1.msra.mxu0 0.0
      %485 = vmatprep.subr.mxu0 0.0
      %486 = vmatpush1.msra.mxu0 0.0
      %487 = vmatprep.subr.mxu0 0.0
      %488 = vmatpush1.msra.mxu0 0.0
      %489 = vmatprep.subr.mxu0 0.0
      %490 = vmatpush1.msra.mxu0 0.0
      %491 = vmatprep.subr.mxu0 0.0
      %492 = vmatpush1.msra.mxu0 0.0
      %493 = vmatprep.subr.mxu0 0.0
      %494 = vmatpush1.msra.mxu0 0.0
      %495 = vmatprep.subr.mxu0 0.0
      %496 = vmatpush1.msra.mxu0 0.0
      %497 = vmatprep.subr.mxu0 0.0
      %498 = vmatpush1.msra.mxu0 0.0
      %499 = vmatprep.subr.mxu0 0.0
      %500 = vmatpush1.msra.mxu0 0.0
      %501 = vmatprep.subr.mxu0 0.0
      %502 = vmatpush1.msra.mxu0 0.0
      %503 = vmatprep.subr.mxu0 0.0
      %504 = vmatpush1.msra.mxu0 0.0
      %505 = vmatprep.subr.mxu0 0.0
      %506 = vmatpush1.msra.mxu0 0.0
      %507 = vmatprep.mubr.f32.mxu0 0.0
      %508 = vmatmul.mubr.f32.gmra.mrb[0].mxu0 %v425
      %v509 = vpop.f32.mrb[0].mxu0
      %v510 = vadd.f32 %v406, %v509
      %v511 = vpop.f32.mrb[0].mxu0
      %v512 = vadd.f32 %v406, %v511
      %513 = vmatprep.mubr.f32.mxu0 0.0
      %514 = vmatmul.mubr.f32.gmra.mrb[0].mxu0 %v428
      %v515 = vpop.f32.mrb[0].mxu0
      %v516 = vadd.f32 %v411, %v515
      %v517 = vpop.f32.mrb[0].mxu0
      %v518 = vadd.f32 %v411, %v517
      %519 = vmatprep.mubr.f32.mxu0 0.0
      %520 = vmatmul.mubr.f32.gmra.mrb[0].mxu0 %v431
      %v521 = vpop.f32.mrb[0].mxu0
      %v522 = vadd.f32 %v416, %v521
      %v523 = vpop.f32.mrb[0].mxu0
      %v524 = vadd.f32 %v416, %v523
      %525 = vmatprep.mubr.f32.mxu0 0.0
      %526 = vmatmul.mubr.f32.gmra.mrb[0].mxu0 %v434
      %v527 = vpop.f32.mrb[0].mxu0
      %v528 = vadd.f32 %v421, %v527
      %v529 = vpop.f32.mrb[0].mxu0
      %v530 = vadd.f32 %v421, %v529
      %531 = vdwg.mxu0
      %v532 = vmax.f32 %v510, 0.0
      %v533 = vmax.f32 %v512, 0.0
      %v534 = vmax.f32 %v516, 0.0
      %v535 = vmax.f32 %v518, 0.0
      %v536 = vmax.f32 %v522, 0.0
      %v537 = vmax.f32 %v524, 0.0
      %v538 = vmax.f32 %v528, 0.0
      %v539 = vmax.f32 %v530, 0.0
      %v540 = vld [vmem:[%s4] sm:$0xff]
      %v541 = vld [vmem:[%s4 + $0x8] sm:$0xff]
      %v542 = vld [vmem:[%s4 + $0x10] sm:$0xff]
      %v543 = vld [vmem:[%s4 + $0x18] sm:$0xff]
      %v544 = vld [vmem:[%s5] sm:$0xff]
      %v545 = vld [vmem:[%s5 + $0x8] sm:$0xff]
      %v546 = vld [vmem:[%s5 + $0x10] sm:$0xff]
      %v547 = vld [vmem:[%s5 + $0x18] sm:$0xff]
      %549 = vset.pattern.permute.xlu0 0
      %550 = vperm.xlu0 %549, %v544
      %v551 = vpop.permute.xlu0 %550
      %554 = vset.pattern.permute.xlu0 0
      %555 = vperm.xlu0 %554, %v545
      %v556 = vpop.permute.xlu0 %555
      %559 = vset.pattern.permute.xlu0 0
      %560 = vperm.xlu0 %559, %v546
      %v561 = vpop.permute.xlu0 %560
      %564 = vset.pattern.permute.xlu0 0
      %565 = vperm.xlu0 %564, %v547
      %v566 = vpop.permute.xlu0 %565
      %vm568 = vcmask 261120
      %v570 = vsel %vm568, %v540, 0
      %v573 = vsel %vm568, %v541, 0
      %v576 = vsel %vm568, %v542, 0
      %v579 = vsel %vm568, %v543, 0
      %581 = vmatprep.subr.mxu0 %v533
      %582 = vmatpush1.msra.mxu0 %v532
      %583 = vmatprep.subr.mxu0 %v535
      %584 = vmatpush1.msra.mxu0 %v534
      %585 = vmatprep.subr.mxu0 %v537
      %586 = vmatpush1.msra.mxu0 %v536
      %587 = vmatprep.subr.mxu0 %v539
      %588 = vmatpush1.msra.mxu0 %v538
      %589 = vmatprep.subr.mxu0 0.0
      %590 = vmatpush1.msra.mxu0 0.0
      %591 = vmatprep.subr.mxu0 0.0
      %592 = vmatpush1.msra.mxu0 0.0
      %593 = vmatprep.subr.mxu0 0.0
      %594 = vmatpush1.msra.mxu0 0.0
      %595 = vmatprep.subr.mxu0 0.0
      %596 = vmatpush1.msra.mxu0 0.0
      %597 = vmatprep.subr.mxu0 0.0
      %598 = vmatpush1.msra.mxu0 0.0
      %599 = vmatprep.subr.mxu0 0.0
      %600 = vmatpush1.msra.mxu0 0.0
      %601 = vmatprep.subr.mxu0 0.0
      %602 = vmatpush1.msra.mxu0 0.0
      %603 = vmatprep.subr.mxu0 0.0
      %604 = vmatpush1.msra.mxu0 0.0
      %605 = vmatprep.subr.mxu0 0.0
      %606 = vmatpush1.msra.mxu0 0.0
      %607 = vmatprep.subr.mxu0 0.0
      %608 = vmatpush1.msra.mxu0 0.0
      %609 = vmatprep.subr.mxu0 0.0
      %610 = vmatpush1.msra.mxu0 0.0
      %611 = vmatprep.subr.mxu0 0.0
      %612 = vmatpush1.msra.mxu0 0.0
      %613 = vmatprep.subr.mxu0 0.0
      %614 = vmatpush1.msra.mxu0 0.0
      %615 = vmatprep.subr.mxu0 0.0
      %616 = vmatpush1.msra.mxu0 0.0
      %617 = vmatprep.subr.mxu0 0.0
      %618 = vmatpush1.msra.mxu0 0.0
      %619 = vmatprep.subr.mxu0 0.0
      %620 = vmatpush1.msra.mxu0 0.0
      %621 = vmatprep.subr.mxu0 0.0
      %622 = vmatpush1.msra.mxu0 0.0
      %623 = vmatprep.subr.mxu0 0.0
      %624 = vmatpush1.msra.mxu0 0.0
      %625 = vmatprep.subr.mxu0 0.0
      %626 = vmatpush1.msra.mxu0 0.0
      %627 = vmatprep.subr.mxu0 0.0
      %628 = vmatpush1.msra.mxu0 0.0
      %629 = vmatprep.subr.mxu0 0.0
      %630 = vmatpush1.msra.mxu0 0.0
      %631 = vmatprep.subr.mxu0 0.0
      %632 = vmatpush1.msra.mxu0 0.0
      %633 = vmatprep.subr.mxu0 0.0
      %634 = vmatpush1.msra.mxu0 0.0
      %635 = vmatprep.subr.mxu0 0.0
      %636 = vmatpush1.msra.mxu0 0.0
      %637 = vmatprep.subr.mxu0 0.0
      %638 = vmatpush1.msra.mxu0 0.0
      %639 = vmatprep.subr.mxu0 0.0
      %640 = vmatpush1.msra.mxu0 0.0
      %641 = vmatprep.subr.mxu0 0.0
      %642 = vmatpush1.msra.mxu0 0.0
      %643 = vmatprep.subr.mxu0 0.0
      %644 = vmatpush1.msra.mxu0 0.0
      %645 = vmatprep.mubr.f32.mxu0 0.0
      %646 = vmatmul.mubr.f32.gmra.mrb[0].mxu0 %v570
      %v647 = vpop.f32.mrb[0].mxu0
      %v648 = vadd.f32 %v551, %v647
      %v649 = vpop.f32.mrb[0].mxu0
      %v650 = vadd.f32 %v551, %v649
      %651 = vmatprep.mubr.f32.mxu0 0.0
      %652 = vmatmul.mubr.f32.gmra.mrb[0].mxu0 %v573
      %v653 = vpop.f32.mrb[0].mxu0
      %v654 = vadd.f32 %v556, %v653
      %v655 = vpop.f32.mrb[0].mxu0
      %v656 = vadd.f32 %v556, %v655
      %657 = vmatprep.mubr.f32.mxu0 0.0
      %658 = vmatmul.mubr.f32.gmra.mrb[0].mxu0 %v576
      %v659 = vpop.f32.mrb[0].mxu0
      %v660 = vadd.f32 %v561, %v659
      %v661 = vpop.f32.mrb[0].mxu0
      %v662 = vadd.f32 %v561, %v661
      %663 = vmatprep.mubr.f32.mxu0 0.0
      %664 = vmatmul.mubr.f32.gmra.mrb[0].mxu0 %v579
      %v665 = vpop.f32.mrb[0].mxu0
      %v666 = vadd.f32 %v566, %v665
      %v667 = vpop.f32.mrb[0].mxu0
      %v668 = vadd.f32 %v566, %v667
      %669 = vdwg.mxu0
      %v670 = vmax.f32 %v648, 0.0
      %v671 = vmax.f32 %v650, 0.0
      %v672 = vmax.f32 %v654, 0.0
      %v673 = vmax.f32 %v656, 0.0
      %v674 = vmax.f32 %v660, 0.0
      %v675 = vmax.f32 %v662, 0.0
      %v676 = vmax.f32 %v666, 0.0
      %v677 = vmax.f32 %v668, 0.0
      %v678 = vld [vmem:[%s6] sm:$0xff]
      %v679 = vld [vmem:[%s6 + $0x8] sm:$0xff]
      %v680 = vld [vmem:[%s6 + $0x10] sm:$0xff]
      %v681 = vld [vmem:[%s6 + $0x18] sm:$0xff]
      %v682 = vld [vmem:[%s6 + $0x20] sm:$0xf]
      %v684 = vsel %vm568, %v678, 0
      %v687 = vsel %vm568, %v679, 0
      %v690 = vsel %vm568, %v680, 0
      %v693 = vsel %vm568, %v681, 0
      %v696 = vsel %vm568, %v682, 0
      %698 = vmatprep.subr.mxu0 %v671
      %699 = vmatpush1.msra.mxu0 %v670
      %700 = vmatprep.subr.mxu0 %v673
      %701 = vmatpush1.msra.mxu0 %v672
      %702 = vmatprep.subr.mxu0 %v675
      %703 = vmatpush1.msra.mxu0 %v674
      %704 = vmatprep.subr.mxu0 %v677
      %705 = vmatpush1.msra.mxu0 %v676
      %706 = vmatprep.subr.mxu0 0.0
      %707 = vmatpush1.msra.mxu0 0.0
      %708 = vmatprep.subr.mxu0 0.0
      %709 = vmatpush1.msra.mxu0 0.0
      %710 = vmatprep.subr.mxu0 0.0
      %711 = vmatpush1.msra.mxu0 0.0
      %712 = vmatprep.subr.mxu0 0.0
      %713 = vmatpush1.msra.mxu0 0.0
      %714 = vmatprep.subr.mxu0 0.0
      %715 = vmatpush1.msra.mxu0 0.0
      %716 = vmatprep.subr.mxu0 0.0
      %717 = vmatpush1.msra.mxu0 0.0
      %718 = vmatprep.subr.mxu0 0.0
      %719 = vmatpush1.msra.mxu0 0.0
      %720 = vmatprep.subr.mxu0 0.0
      %721 = vmatpush1.msra.mxu0 0.0
      %722 = vmatprep.subr.mxu0 0.0
      %723 = vmatpush1.msra.mxu0 0.0
      %724 = vmatprep.subr.mxu0 0.0
      %725 = vmatpush1.msra.mxu0 0.0
      %726 = vmatprep.subr.mxu0 0.0
      %727 = vmatpush1.msra.mxu0 0.0
      %728 = vmatprep.subr.mxu0 0.0
      %729 = vmatpush1.msra.mxu0 0.0
      %730 = vmatprep.subr.mxu0 0.0
      %731 = vmatpush1.msra.mxu0 0.0
      %732 = vmatprep.subr.mxu0 0.0
      %733 = vmatpush1.msra.mxu0 0.0
      %734 = vmatprep.subr.mxu0 0.0
      %735 = vmatpush1.msra.mxu0 0.0
      %736 = vmatprep.subr.mxu0 0.0
      %737 = vmatpush1.msra.mxu0 0.0
      %738 = vmatprep.subr.mxu0 0.0
      %739 = vmatpush1.msra.mxu0 0.0
      %740 = vmatprep.subr.mxu0 0.0
      %741 = vmatpush1.msra.mxu0 0.0
      %742 = vmatprep.subr.mxu0 0.0
      %743 = vmatpush1.msra.mxu0 0.0
      %744 = vmatprep.subr.mxu0 0.0
      %745 = vmatpush1.msra.mxu0 0.0
      %746 = vmatprep.subr.mxu0 0.0
      %747 = vmatpush1.msra.mxu0 0.0
      %748 = vmatprep.subr.mxu0 0.0
      %749 = vmatpush1.msra.mxu0 0.0
      %750 = vmatprep.subr.mxu0 0.0
      %751 = vmatpush1.msra.mxu0 0.0
      %752 = vmatprep.subr.mxu0 0.0
      %753 = vmatpush1.msra.mxu0 0.0
      %754 = vmatprep.subr.mxu0 0.0
      %755 = vmatpush1.msra.mxu0 0.0
      %756 = vmatprep.subr.mxu0 0.0
      %757 = vmatpush1.msra.mxu0 0.0
      %758 = vmatprep.subr.mxu0 0.0
      %759 = vmatpush1.msra.mxu0 0.0
      %760 = vmatprep.subr.mxu0 0.0
      %761 = vmatpush1.msra.mxu0 0.0
      %762 = vmatprep.mubr.f32.mxu0 0.0
      %763 = vmatmul.mubr.f32.gmra.mrb[0].mxu0 %v684
      %v764 = vpop.f32.mrb[0].mxu0
      %v765 = vadd.f32 0.0, %v764
      %v766 = vpop.f32.mrb[0].mxu0
      %v767 = vadd.f32 0.0, %v766
      %768 = vmatprep.mubr.f32.mxu0 0.0
      %769 = vmatmul.mubr.f32.gmra.mrb[0].mxu0 %v687
      %v770 = vpop.f32.mrb[0].mxu0
      %v771 = vadd.f32 0.0, %v770
      %v772 = vpop.f32.mrb[0].mxu0
      %v773 = vadd.f32 0.0, %v772
      %774 = vmatprep.mubr.f32.mxu0 0.0
      %775 = vmatmul.mubr.f32.gmra.mrb[0].mxu0 %v690
      %v776 = vpop.f32.mrb[0].mxu0
      %v777 = vadd.f32 0.0, %v776
      %v778 = vpop.f32.mrb[0].mxu0
      %v779 = vadd.f32 0.0, %v778
      %780 = vmatprep.mubr.f32.mxu0 0.0
      %781 = vmatmul.mubr.f32.gmra.mrb[0].mxu0 %v693
      %v782 = vpop.f32.mrb[0].mxu0
      %v783 = vadd.f32 0.0, %v782
      %v784 = vpop.f32.mrb[0].mxu0
      %v785 = vadd.f32 0.0, %v784
      %786 = vmatprep.mubr.f32.mxu0 0.0
      %787 = vmatmul.mubr.f32.gmra.mrb[0].mxu0 %v696
      %v788 = vpop.f32.mrb[0].mxu0
      %v789 = vadd.f32 0.0, %v788
      %v790 = vpop.f32.mrb[0].mxu0
      %v791 = vadd.f32 0.0, %v790
      %792 = vdwg.mxu0
      %793 = vrot.lane.b32.xlu0 %v765, 17
      %v794 = vpop.permute.xlu0 %793
      %795 = vrot.lane.b32.xlu0 %v767, 17
      %v796 = vpop.permute.xlu0 %795
      %v797 = vlaneseq
      %v798 = vand.u32 %v797, 127
      %vm799 = vcmp.lt.s32.totalorder %v798, 17
      %v800 = vsel %vm799, %v794, %v796
      %v801 = vsel %vm799, %v796, %v794
      %v802 = vld [vmem:[%s8] sm:$0x3]
      %v804 = vlaneseq
      %v805 = vshrl.u32 %v804, 7
      %v806 = vsub.s32 0, %v805
      %v807 = vrot.slane %v802, %v806
      %v808 = vlaneseq
      %v809 = vshrl.u32 %v808, 7
      %v810 = vsub.s32 1, %v809
      %v811 = vrot.slane %v802, %v810
      %v814 = vmul.f32 %v807, %v801
      %v815 = vmul.f32 %v811, %v800
      %v816 = vadd.f32 %v814, 0.0
      %v817 = vadd.f32 %v815, 0.0
      %v820 = vrot.slane %v765, 4
      %v821 = vrot.slane %v767, 4
      %824 = vrot.lane.b32.xlu0 %v820, 16
      %v825 = vpop.permute.xlu0 %824
      %826 = vrot.lane.b32.xlu0 %v821, 16
      %v827 = vpop.permute.xlu0 %826
      %vm828 = vcmp.lt.s32.totalorder %v798, 16
      %v829 = vsel %vm828, %v825, %v827
      %v830 = vsel %vm828, %v827, %v825
      %s831 = scalar_lea.vmem %s8, 2
      %v832 = vld [vmem:[%s831] sm:$0x3]
      %v834 = vlaneseq
      %v835 = vshrl.u32 %v834, 7
      %v836 = vsub.s32 0, %v835
      %v837 = vrot.slane %v832, %v836
      %v838 = vlaneseq
      %v839 = vshrl.u32 %v838, 7
      %v840 = vsub.s32 1, %v839
      %v841 = vrot.slane %v832, %v840
      %v844 = vmul.f32 %v837, %v830
      %v845 = vmul.f32 %v841, %v829
      %v846 = vadd.f32 %v816, %v844
      %v847 = vadd.f32 %v817, %v845
      %848 = vrot.lane.b32.xlu0 %v771, 15
      %v849 = vpop.permute.xlu0 %848
      %850 = vrot.lane.b32.xlu0 %v773, 15
      %v851 = vpop.permute.xlu0 %850
      %vm852 = vcmp.lt.s32.totalorder %v798, 15
      %v853 = vsel %vm852, %v849, %v851
      %v854 = vsel %vm852, %v851, %v849
      %s855 = scalar_lea.vmem %s8, 4
      %v856 = vld [vmem:[%s855] sm:$0x3]
      %v858 = vlaneseq
      %v859 = vshrl.u32 %v858, 7
      %v860 = vsub.s32 0, %v859
      %v861 = vrot.slane %v856, %v860
      %v862 = vlaneseq
      %v863 = vshrl.u32 %v862, 7
      %v864 = vsub.s32 1, %v863
      %v865 = vrot.slane %v856, %v864
      %v868 = vmul.f32 %v861, %v854
      %v869 = vmul.f32 %v865, %v853
      %v870 = vadd.f32 %v846, %v868
      %v871 = vadd.f32 %v847, %v869
      %v874 = vrot.slane %v771, 4
      %v875 = vrot.slane %v773, 4
      %878 = vrot.lane.b32.xlu0 %v874, 1
      %v879 = vpop.permute.xlu0 %878
      %880 = vrot.lane.b32.xlu0 %v875, 1
      %v881 = vpop.permute.xlu0 %880
      %vm882 = vcmp.lt.s32.totalorder %v798, 1
      %v883 = vsel %vm882, %v879, %v881
      %v884 = vsel %vm882, %v881, %v879
      %s885 = scalar_lea.vmem %s8, 6
      %v886 = vld [vmem:[%s885] sm:$0x3]
      %v888 = vlaneseq
      %v889 = vshrl.u32 %v888, 7
      %v890 = vsub.s32 0, %v889
      %v891 = vrot.slane %v886, %v890
      %v892 = vlaneseq
      %v893 = vshrl.u32 %v892, 7
      %v894 = vsub.s32 1, %v893
      %v895 = vrot.slane %v886, %v894
      %v898 = vmul.f32 %v891, %v884
      %v899 = vmul.f32 %v895, %v883
      %v900 = vadd.f32 %v870, %v898
      %v901 = vadd.f32 %v871, %v899
      %v902 = vadd.f32 %v900, %v777
      %v903 = vadd.f32 %v901, %v779
      %v906 = vrot.slane %v777, 4
      %v907 = vrot.slane %v779, 4
      %910 = vrot.lane.b32.xlu0 %v906, 127
      %v911 = vpop.permute.xlu0 %910
      %912 = vrot.lane.b32.xlu0 %v907, 127
      %v913 = vpop.permute.xlu0 %912
      %vm914 = vcmp.lt.s32.totalorder %v798, 127
      %v915 = vsel %vm914, %v911, %v913
      %v916 = vsel %vm914, %v913, %v911
      %s917 = scalar_lea.vmem %s8, 10
      %v918 = vld [vmem:[%s917] sm:$0x3]
      %v920 = vlaneseq
      %v921 = vshrl.u32 %v920, 7
      %v922 = vsub.s32 0, %v921
      %v923 = vrot.slane %v918, %v922
      %v924 = vlaneseq
      %v925 = vshrl.u32 %v924, 7
      %v926 = vsub.s32 1, %v925
      %v927 = vrot.slane %v918, %v926
      %v930 = vmul.f32 %v923, %v915
      %v931 = vmul.f32 %v927, %v916
      %v932 = vadd.f32 %v902, %v930
      %v933 = vadd.f32 %v903, %v931
      %934 = vrot.lane.b32.xlu0 %v783, 113
      %v935 = vpop.permute.xlu0 %934
      %936 = vrot.lane.b32.xlu0 %v785, 113
      %v937 = vpop.permute.xlu0 %936
      %vm938 = vcmp.lt.s32.totalorder %v798, 113
      %v939 = vsel %vm938, %v935, %v937
      %v940 = vsel %vm938, %v937, %v935
      %s941 = scalar_lea.vmem %s8, 12
      %v942 = vld [vmem:[%s941] sm:$0x3]
      %v944 = vlaneseq
      %v945 = vshrl.u32 %v944, 7
      %v946 = vsub.s32 0, %v945
      %v947 = vrot.slane %v942, %v946
      %v948 = vlaneseq
      %v949 = vshrl.u32 %v948, 7
      %v950 = vsub.s32 1, %v949
      %v951 = vrot.slane %v942, %v950
      %v954 = vmul.f32 %v947, %v939
      %v955 = vmul.f32 %v951, %v940
      %v956 = vadd.f32 %v932, %v954
      %v957 = vadd.f32 %v933, %v955
      %v960 = vrot.slane %v783, 4
      %v961 = vrot.slane %v785, 4
      %964 = vrot.lane.b32.xlu0 %v960, 112
      %v965 = vpop.permute.xlu0 %964
      %966 = vrot.lane.b32.xlu0 %v961, 112
      %v967 = vpop.permute.xlu0 %966
      %vm968 = vcmp.lt.s32.totalorder %v798, 112
      %v969 = vsel %vm968, %v965, %v967
      %v970 = vsel %vm968, %v967, %v965
      %s971 = scalar_lea.vmem %s8, 14
      %v972 = vld [vmem:[%s971] sm:$0x3]
      %v974 = vlaneseq
      %v975 = vshrl.u32 %v974, 7
      %v976 = vsub.s32 0, %v975
      %v977 = vrot.slane %v972, %v976
      %v978 = vlaneseq
      %v979 = vshrl.u32 %v978, 7
      %v980 = vsub.s32 1, %v979
      %v981 = vrot.slane %v972, %v980
      %v984 = vmul.f32 %v977, %v969
      %v985 = vmul.f32 %v981, %v970
      %v986 = vadd.f32 %v956, %v984
      %v987 = vadd.f32 %v957, %v985
      %988 = vrot.lane.b32.xlu0 %v789, 111
      %v989 = vpop.permute.xlu0 %988
      %990 = vrot.lane.b32.xlu0 %v791, 111
      %v991 = vpop.permute.xlu0 %990
      %vm992 = vcmp.lt.s32.totalorder %v798, 111
      %v993 = vsel %vm992, %v989, %v991
      %v994 = vsel %vm992, %v991, %v989
      %s995 = scalar_lea.vmem %s8, 16
      %v996 = vld [vmem:[%s995] sm:$0x3]
      %v998 = vlaneseq
      %v999 = vshrl.u32 %v998, 7
      %v1000 = vsub.s32 0, %v999
      %v1001 = vrot.slane %v996, %v1000
      %v1002 = vlaneseq
      %v1003 = vshrl.u32 %v1002, 7
      %v1004 = vsub.s32 1, %v1003
      %v1005 = vrot.slane %v996, %v1004
      %v1008 = vmul.f32 %v1001, %v993
      %v1009 = vmul.f32 %v1005, %v994
      %v1010 = vadd.f32 %v986, %v1008
      %v1011 = vadd.f32 %v987, %v1009
      %v1012 = vld [vmem:[%s7] sm:$0xf]
      %1014 = vset.pattern.permute.xlu0 0
      %1015 = vperm.xlu0 %1014, %v1012
      %v1016 = vpop.permute.xlu0 %1015
      %v1018 = vadd.f32 %v1010, %v1016
      %v1019 = vadd.f32 %v1011, %v1016
      %v1020 = vadd.f32 %v1018, 2.0
      %v1021 = vadd.f32 %v1019, 2.0
      %v1022 = vxor.u32 %v1020, 2147483648
      %v1023 = vxor.u32 %v1021, 2147483648
      %v1024 = vmul.f32 %v1022, 1.442695
      %v1025 = vpow.pop %v1024
      %v1026 = vmul.f32 %v1023, 1.442695
      %v1027 = vpow.pop %v1026
      %v1028 = vadd.f32 %v1025, 1.0
      %v1029 = vadd.f32 %v1027, 1.0
      %v1030 = vrcp.pop %v1028
      %v1031 = vmul.f32 1.0, %v1030
      %v1032 = vrcp.pop %v1029
      %v1033 = vmul.f32 1.0, %v1032
      %v1034 = vld [vmem:[%s380] sm:$0xf]
      %v1037 = vcombine.low %v1031, %v1033
      %v1039 = vunpack.c.l.s4 1983009808
      %v1040 = vunpack.c.0.s8 %v1039
      %v1041 = vlaneseq
      %v1042 = vshrl.u32 %v1041, 7
      %v1043 = vsub.s32 %v1040, %v1042
      %v1044 = vrot.slane %v1037, %v1043
      %v1045 = vcombine.high %v1044, %v1044
      %v1047 = vmul.f32 %v1034, %v1045
      %v1050 = vcombine.low %v1018, %v1019
      %v1052 = vunpack.c.l.s4 1983009808
      %v1053 = vunpack.c.0.s8 %v1052
      %v1054 = vlaneseq
      %v1055 = vshrl.u32 %v1054, 7
      %v1056 = vsub.s32 %v1053, %v1055
      %v1057 = vrot.slane %v1050, %v1056
      %v1059 = vadd.f32 %v1047, %v1057
      %1060 = vst [vmem:[%s385] sm:$0xf] %v1059
      %v1061 = vsub.f32 0.0, %v1020
      %v1062 = vsub.f32 0.0, %v1021
      %v1063 = vmax.f32 %v1061, 0.0
      %v1064 = vmax.f32 %v1062, 0.0
      %v1065 = vand.u32 2147483647, %v1061
      %v1066 = vand.u32 2147483647, %v1062
      %v1067 = vsub.f32 0.0, %v1065
      %v1068 = vsub.f32 0.0, %v1066
      %v1069 = vmul.f32 %v1067, 1.442695
      %v1070 = vpow.pop %v1069
      %v1071 = vmul.f32 %v1068, 1.442695
      %v1072 = vpow.pop %v1071
      %v1073 = vadd.f32 %v1070, 1.0
      %v1074 = vadd.f32 %v1072, 1.0
      %v1075 = vlog2.pop %v1073
      %v1076 = vmul.f32 %v1075, 0.6931472
      %v1077 = vlog2.pop %v1074
      %v1078 = vmul.f32 %v1077, 0.6931472
      %v1079 = vadd.f32 %v1063, %v1076
      %v1080 = vadd.f32 %v1064, %v1078
      %v1081 = vsub.f32 0.0, %v1079
      %v1082 = vsub.f32 0.0, %v1080
      %vm1083 = vcmask 1043458
      %v1084 = vsel %vm1083, %v1081, 0.0
      %v1085 = vsel %vm1083, %v1082, 0.0
      %v1086 = vadd.f32 %v1084, %v1085
      %1087 = vadd.xlane.f32.xlu0 %v1086
      %v1088 = vpop.xlane.xlu0 %1087
      %v1090 = vrot.slane %v1088, 2
      %v1092 = vsel %vm436, %v1090, 0.0
      %v1093 = vrot.slane %v1092, 4
      %v1094 = vadd.f32 %v1092, %v1093
      %v1095 = vrot.slane %v1094, 2
      %v1096 = vadd.f32 %v1094, %v1095
      %v1097 = vrot.slane %v1096, 1
      %v1098 = vadd.f32 %v1096, %v1097
      %vm1099 = vcmask 0
      %1100 = vst.msk [vmem:[%s388] sm:$0x1] %vm1099, %v1098
      %p1101 = scmp.lt.s32.totalorder %s22, 1
      %s1102 = scalar_select %p1101, %s22, 1
      %s1103 = smul.addr %s1102, 2
      %s1104 = smul.addr %s1103, 2
      %s1105 = scalar_lea.vmem %s9, %s1104
      %p1106 = scmp.lt.s32.totalorder %s22, 1
      %s1107 = scalar_select %p1106, %s22, 1
      %s1108 = scalar_lea.vmem %s10, %s1107
      // Predicated region
      $region57: #{affine_coupling_forward.1} parent=55 // pred_check
        %p1109 = pneg %p239
      $region58: #{affine_coupling_forward.1} parent=55 // pred_check_branch
        %1111 = sbr.rel (%p1109) target = $region60
      $region59: #{affine_coupling_forward.1} parent=55 // pred_region
        _
      $region60: #{affine_coupling_forward.1} parent=55 // pred_fallthru
        _
      // Predicated region
      $region61: #{affine_coupling_forward.1} parent=55 // pred_check
        %p1112 = pneg %p265
      $region62: #{affine_coupling_forward.1} parent=55 // pred_check_branch
        %1114 = sbr.rel (%p1112) target = $region64
      $region63: #{affine_coupling_forward.1} parent=55 // pred_region
        _
      $region64: #{affine_coupling_forward.1} parent=55 // pred_fallthru
        _
    $region56: #{affine_coupling_forward.1} parent=5 // pred_fallthru
      _
    %p1115 = scmp.le.s32.totalorder 2, %s17
    // Predicated region
    $region65: #{affine_coupling_forward.1} parent=5 // pred_check
      %p1116 = pneg %p1115
    $region66: #{affine_coupling_forward.1} parent=5 // pred_check_branch
      %1118 = sbr.rel (%p1116) target = $region68
    $region67: #{affine_coupling_forward.1} parent=5 // pred_region
      %s1119 = ssub.s32 %s17, 2
      // Predicated region
      $region69: #{affine_coupling_forward.1} parent=67 // pred_check
        %p1120 = pneg %p245
      $region70: #{affine_coupling_forward.1} parent=67 // pred_check_branch
        %1122 = sbr.rel (%p1120) target = $region72
      $region71: #{affine_coupling_forward.1} parent=67 // pred_region
        %p1123 = scmp.lt.s32.totalorder %s23, 1
        %s1124 = scalar_select %p1123, %s23, 1
        %s1125 = smul.addr %s1124, 2
        %s1126 = smul.addr %s1125, 2
        %s1127 = scalar_lea.vmem %s9, %s1126
      $region72: #{affine_coupling_forward.1} parent=67 // pred_fallthru
        _
      // Predicated region
      $region73: #{affine_coupling_forward.1} parent=67 // pred_check
        %p1128 = pneg %p271
      $region74: #{affine_coupling_forward.1} parent=67 // pred_check_branch
        %1130 = sbr.rel (%p1128) target = $region76
      $region75: #{affine_coupling_forward.1} parent=67 // pred_region
        %p1131 = scmp.lt.s32.totalorder %s23, 1
        %s1132 = scalar_select %p1131, %s23, 1
        %s1133 = scalar_lea.vmem %s10, %s1132
      $region76: #{affine_coupling_forward.1} parent=67 // pred_fallthru
        _
    $region68: #{affine_coupling_forward.1} parent=5 // pred_fallthru
      _
  $region6: #{affine_coupling_forward.1} parent=0 // loop_footer
    %s21 = sadd.s32 1, %s17
  $region7: #{affine_coupling_forward.1} parent=0 // loop_footer_branch
    %16 = sbr.rel target = $region3
  $region8: #{affine_coupling_forward.1} parent=0 // loop_exit
    _

</llo_original>
